<compile_context>
chip_gen: v6e
topology: v6e:2x2x1
jax: 0.10.0
libtpu: 0.0.40
codegen_flags: <defaults>
</compile_context>

<pallas_src>
import math

import jax
import jax.numpy as jnp
from jax.experimental import pallas as pl
from jax.experimental.pallas import tpu as pltpu

SUBLANE = 8                       # TPU sublane granule (second-to-last dim)
_VMEM_TILE_BUDGET = 24 * 1024 * 1024   # per-step activation budget (bytes)


def _round_up(x, m):
    return ((x + m - 1) // m) * m


# --------------------------------------------------------------------------
# Kernel
# --------------------------------------------------------------------------
def _fdm_kernel(state_ref, action_ref,
                ws_ref, bs_ref, wa_ref, ba_ref,
                w1s_ref, w1a_ref, b1_ref, wh_ref, bh_ref,
                out_ref):
    w_dt = ws_ref.dtype

    # s = relu(state @ Ws + bs)   (f32 accumulation, f32 bias/ReLU)
    s = jnp.dot(state_ref[...].astype(w_dt), ws_ref[...],
                preferred_element_type=jnp.float32) + bs_ref[...]
    s = jnp.maximum(s, 0.0)

    # a = relu(action @ Wa + ba)
    a = jnp.dot(action_ref[...].astype(w_dt), wa_ref[...],
                preferred_element_type=jnp.float32) + ba_ref[...]
    a = jnp.maximum(a, 0.0)

    # h = relu(concat(s, a) @ W1 + b1) == relu(s @ W1_top + a @ W1_bot + b1)
    h = (jnp.dot(s.astype(w1s_ref.dtype), w1s_ref[...],
                 preferred_element_type=jnp.float32)
         + jnp.dot(a.astype(w1a_ref.dtype), w1a_ref[...],
                   preferred_element_type=jnp.float32)
         + b1_ref[...])
    h = jnp.maximum(h, 0.0)

    # y = h @ Wh + bh  (head, no activation), written unpadded.
    y = jnp.dot(h.astype(wh_ref.dtype), wh_ref[...],
                preferred_element_type=jnp.float32) + bh_ref[...]
    out_ref[...] = y.astype(out_ref.dtype)


# --------------------------------------------------------------------------
# Tile selection
# --------------------------------------------------------------------------
def _select_tile_b(batch, tile_b, s, a, h, in_bytes, out_bytes):
    if batch <= SUBLANE:
        # Single block whose row dim equals the full array dim (always legal).
        return batch
    tb = _round_up(max(min(tile_b, batch), SUBLANE), SUBLANE)
    # Ensure >= 2 grid steps so both v7x TensorCores get work (free elsewhere).
    half = _round_up((batch + 1) // 2, SUBLANE)
    tb = min(tb, half)
    # Clamp so the per-step VMEM footprint (double-buffered streamed I/O plus
    # the f32 intermediates s/a/h/y) fits the budget on every generation.
    per_row = (2 * (s + a) * in_bytes      # state+action tiles, double-buffered
               + 2 * s * out_bytes         # output tile, double-buffered
               + 4 * (3 * h + s))          # f32 intermediates s, a, h, y
    max_rows = max(SUBLANE, (_VMEM_TILE_BUDGET // per_row) // SUBLANE * SUBLANE)
    return max(SUBLANE, min(tb, max_rows))


# --------------------------------------------------------------------------
# Wrapper
# --------------------------------------------------------------------------
def forward_dynamic_model(state, action, packed_params, *, tile_b=4096,
                          out_dtype=jnp.float32, return_stats=False):
    """Fused forward pass. state: (B, S), action: (B, A) -> (B, S)."""
    ws, bs, wa, ba, w1s, w1a, b1, wh, bh = packed_params
    B, S = state.shape
    A = action.shape[1]
    H = ws.shape[1]

    in_bytes = max(jnp.dtype(state.dtype).itemsize,
                   jnp.dtype(action.dtype).itemsize)
    out_bytes = jnp.dtype(out_dtype).itemsize
    tb = _select_tile_b(B, tile_b, S, A, H, in_bytes, out_bytes)
    grid = (pl.cdiv(B, tb),)

    def resident(arr):
        # Constant index_map -> block stays VMEM-resident across batch tiles.
        return pl.BlockSpec(arr.shape, lambda i: (0,) * arr.ndim)

    out = pl.pallas_call(
        _fdm_kernel,
        out_shape=jax.ShapeDtypeStruct((B, S), out_dtype),
        grid=grid,
        in_specs=[
            pl.BlockSpec((tb, S), lambda i: (i, 0)),   # streamed state rows
            pl.BlockSpec((tb, A), lambda i: (i, 0)),   # streamed action rows
            resident(ws), resident(bs), resident(wa), resident(ba),
            resident(w1s), resident(w1a), resident(b1),
            resident(wh), resident(bh),
        ],
        out_specs=pl.BlockSpec((tb, S), lambda i: (i, 0)),
        compiler_params=pltpu.CompilerParams(
            dimension_semantics=("parallel",),
            vmem_limit_bytes=32 * 1024 * 1024),
    )(state, action, ws, bs, wa, ba, w1s, w1a, b1, wh, bh)

    if return_stats:
        return out, {}
    return out


# --------------------------------------------------------------------------
# Parameter init (PyTorch-equivalent) + packing for the kernel
# --------------------------------------------------------------------------
def _xavier_uniform(key, fan_in, fan_out):
    # torch.nn.init.xavier_uniform_ on a (fan_out, fan_in) weight; stored
    # transposed as (fan_in, fan_out) so forward is x @ W.
    bound = math.sqrt(6.0 / (fan_in + fan_out))
    return jax.random.uniform(key, (fan_in, fan_out), jnp.float32, -bound, bound)


def init_params(key, state_size, action_size, hidden_size):
    k_s, k_a, k_1, k_h = jax.random.split(key, 4)
    ws = _xavier_uniform(k_s, state_size, hidden_size)
    bs = jnp.zeros((hidden_size,), jnp.float32)
    wa = _xavier_uniform(k_a, action_size, hidden_size)
    ba = jnp.zeros((hidden_size,), jnp.float32)
    w1 = _xavier_uniform(k_1, 2 * hidden_size, hidden_size)
    b1 = jnp.zeros((hidden_size,), jnp.float32)
    wh = _xavier_uniform(k_h, hidden_size, state_size)
    bh = jnp.zeros((state_size,), jnp.float32)
    return (ws, bs, wa, ba, w1, b1, wh, bh)


def pack_params(params, dtype=jnp.bfloat16):
    """Re-layout parameters for the kernel (no padding needed).

    Weights are stored (fan_in, fan_out) so forward is `x @ W`.  dense_1's
    weight is split by rows into the part multiplying `s` (first H rows) and
    the part multiplying `a` (last H rows) so the kernel never concatenates.
    Biases stay f32 (bias-add / ReLU run in f32 on the VPU); weights default
    to bfloat16 for halved HBM traffic, with f32 MXU accumulation in-kernel.
    """
    ws, bs, wa, ba, w1, b1, wh, bh = params
    H = ws.shape[1]

    def as_row(b):
        return b.reshape(1, -1).astype(jnp.float32)

    return (ws.astype(dtype), as_row(bs),
            wa.astype(dtype), as_row(ba),
            w1[:H].astype(dtype), w1[H:].astype(dtype), as_row(b1),
            wh.astype(dtype), as_row(bh))


# --------------------------------------------------------------------------
# Pure-JAX reference (mirrors the PyTorch forward exactly)
# --------------------------------------------------------------------------
def _reference(state, action, params):
    ws, bs, wa, ba, w1, b1, wh, bh = params
    s = jax.nn.relu(state @ ws + bs)
    a = jax.nn.relu(action @ wa + ba)
    x = jax.nn.relu(jnp.concatenate([s, a], axis=1) @ w1 + b1)
    return x @ wh + bh


if __name__ == "__main__":
    state_size, action_size, hidden_size = 16, 4, 32

    key = jax.random.PRNGKey(0)
    k_params, k_state, k_action, k_bias = jax.random.split(key, 4)

    params = init_params(k_params, state_size, action_size, hidden_size)

    # The module inits biases to zero; perturb them (test-only) so the bias
    # paths are actually exercised by the checks.
    ws, bs, wa, ba, w1, b1, wh, bh = params
    kb1, kb2, kb3, kb4 = jax.random.split(k_bias, 4)
    bs = 0.1 * jax.random.normal(kb1, bs.shape, jnp.float32)
    ba = 0.1 * jax.random.normal(kb2, ba.shape, jnp.float32)
    b1 = 0.1 * jax.random.normal(kb3, b1.shape, jnp.float32)
    bh = 0.1 * jax.random.normal(kb4, bh.shape, jnp.float32)
    params = (ws, bs, wa, ba, w1, b1, wh, bh)

    packed_f32 = pack_params(params, dtype=jnp.float32)

    # --- Check 1: tiny batch (single block == full array dims), f32, tight ---
    state = jax.random.normal(k_state, (2, state_size), jnp.float32)
    action = jax.random.normal(k_action, (2, action_size), jnp.float32)
    out = jax.block_until_ready(forward_dynamic_model(state, action, packed_f32))
    ref = _reference(state, action, params)
    assert out.shape == (2, state_size)
    assert jnp.allclose(out, ref, atol=1e-5, rtol=1e-5), "mismatch (f32, B=2)"

    # --- Check 2: multi-step grid with a ragged last batch tile, f32 ---
    k_state2, k_action2 = jax.random.split(jax.random.PRNGKey(1))
    state2 = jax.random.normal(k_state2, (37, state_size), jnp.float32)
    action2 = jax.random.normal(k_action2, (37, action_size), jnp.float32)
    out2 = jax.block_until_ready(
        forward_dynamic_model(state2, action2, packed_f32, tile_b=16))
    ref2 = _reference(state2, action2, params)
    assert out2.shape == (37, state_size)
    assert jnp.allclose(out2, ref2, atol=1e-5, rtol=1e-5), \
        "mismatch (f32, ragged tiles)"

    # --- Check 3: default bf16 weight packing + bf16 streamed activations
    #     (f32 accumulation in-kernel); looser tolerance vs. the f32 reference.
    packed_bf16 = pack_params(params)            # dtype defaults to bfloat16
    out3 = jax.block_until_ready(
        forward_dynamic_model(state2.astype(jnp.bfloat16),
                              action2.astype(jnp.bfloat16),
                              packed_bf16))
    assert out3.shape == (37, state_size)
    assert jnp.allclose(out3, ref2, atol=1e-1, rtol=1e-1), "mismatch (bf16 path)"

    print("KERNEL_OK")
</pallas_src>

<mosaic_0001>
module attributes {stable_mosaic.version = 11 : i64} {
  func.func @_fdm_kernel(%arg0: i32, %arg1: memref<2x16xf32, #tpu.memory_space<vmem>>, %arg2: memref<2x4xf32, #tpu.memory_space<vmem>>, %arg3: memref<16x32xf32, #tpu.memory_space<vmem>>, %arg4: memref<1x32xf32, #tpu.memory_space<vmem>>, %arg5: memref<4x32xf32, #tpu.memory_space<vmem>>, %arg6: memref<1x32xf32, #tpu.memory_space<vmem>>, %arg7: memref<32x32xf32, #tpu.memory_space<vmem>>, %arg8: memref<32x32xf32, #tpu.memory_space<vmem>>, %arg9: memref<1x32xf32, #tpu.memory_space<vmem>>, %arg10: memref<32x16xf32, #tpu.memory_space<vmem>>, %arg11: memref<1x16xf32, #tpu.memory_space<vmem>>, %arg12: memref<2x16xf32, #tpu.memory_space<vmem>>) attributes {dimension_semantics = [#tpu.dimension_semantics<parallel>], iteration_bounds = array<i64: 1>, scalar_prefetch = 0 : i64, scratch_operands = 0 : i64, tpu.core_type = #tpu.core_type<tc>, window_params = [{transform_indices = @transform_0, window_bounds = array<i64: 2, 16>}, {transform_indices = @transform_1, window_bounds = array<i64: 2, 4>}, {pipeline_mode = #tpu.pipeline_mode<synchronous>, transform_indices = @transform_2, window_bounds = array<i64: 16, 32>}, {pipeline_mode = #tpu.pipeline_mode<synchronous>, transform_indices = @transform_3, window_bounds = array<i64: 1, 32>}, {pipeline_mode = #tpu.pipeline_mode<synchronous>, transform_indices = @transform_4, window_bounds = array<i64: 4, 32>}, {pipeline_mode = #tpu.pipeline_mode<synchronous>, transform_indices = @transform_5, window_bounds = array<i64: 1, 32>}, {pipeline_mode = #tpu.pipeline_mode<synchronous>, transform_indices = @transform_6, window_bounds = array<i64: 32, 32>}, {pipeline_mode = #tpu.pipeline_mode<synchronous>, transform_indices = @transform_7, window_bounds = array<i64: 32, 32>}, {pipeline_mode = #tpu.pipeline_mode<synchronous>, transform_indices = @transform_8, window_bounds = array<i64: 1, 32>}, {pipeline_mode = #tpu.pipeline_mode<synchronous>, transform_indices = @transform_9, window_bounds = array<i64: 32, 16>}, {pipeline_mode = #tpu.pipeline_mode<synchronous>, transform_indices = @transform_10, window_bounds = array<i64: 1, 16>}, {transform_indices = @transform_11, window_bounds = array<i64: 2, 16>}]} {
    %c0 = arith.constant 0 : index
    %c0_0 = arith.constant 0 : index
    %0 = vector.load %arg1[%c0, %c0_0] : memref<2x16xf32, #tpu.memory_space<vmem>>, vector<2x16xf32>
    %c0_1 = arith.constant 0 : index
    %c0_2 = arith.constant 0 : index
    %1 = vector.load %arg3[%c0_1, %c0_2] : memref<16x32xf32, #tpu.memory_space<vmem>>, vector<16x32xf32>
    %cst = arith.constant dense<0.000000e+00> : vector<2x32xf32>
    %2 = tpu.matmul %0, %1, %cst {dimension_numbers = #tpu.dot_dimension_numbers<[1], [0], [0], [1], [0, 0, 1, 1], [], []>} : vector<2x16xf32>, vector<16x32xf32>, vector<2x32xf32> -> vector<2x32xf32>
    %c0_3 = arith.constant 0 : index
    %c0_4 = arith.constant 0 : index
    %3 = vector.load %arg4[%c0_3, %c0_4] : memref<1x32xf32, #tpu.memory_space<vmem>>, vector<1x32xf32>
    %4 = vector.broadcast %3 : vector<1x32xf32> to vector<2x32xf32>
    %5 = arith.addf %2, %4 : vector<2x32xf32>
    %cst_5 = arith.constant 0.000000e+00 : f32
    %6 = vector.broadcast %cst_5 : f32 to vector<2x32xf32>
    %7 = arith.maximumf %5, %6 : vector<2x32xf32>
    %c0_6 = arith.constant 0 : index
    %c0_7 = arith.constant 0 : index
    %8 = vector.load %arg2[%c0_6, %c0_7] : memref<2x4xf32, #tpu.memory_space<vmem>>, vector<2x4xf32>
    %c0_8 = arith.constant 0 : index
    %c0_9 = arith.constant 0 : index
    %9 = vector.load %arg5[%c0_8, %c0_9] : memref<4x32xf32, #tpu.memory_space<vmem>>, vector<4x32xf32>
    %cst_10 = arith.constant dense<0.000000e+00> : vector<2x32xf32>
    %10 = tpu.matmul %8, %9, %cst_10 {dimension_numbers = #tpu.dot_dimension_numbers<[1], [0], [0], [1], [0, 0, 1, 1], [], []>} : vector<2x4xf32>, vector<4x32xf32>, vector<2x32xf32> -> vector<2x32xf32>
    %c0_11 = arith.constant 0 : index
    %c0_12 = arith.constant 0 : index
    %11 = vector.load %arg6[%c0_11, %c0_12] : memref<1x32xf32, #tpu.memory_space<vmem>>, vector<1x32xf32>
    %12 = vector.broadcast %11 : vector<1x32xf32> to vector<2x32xf32>
    %13 = arith.addf %10, %12 : vector<2x32xf32>
    %cst_13 = arith.constant 0.000000e+00 : f32
    %14 = vector.broadcast %cst_13 : f32 to vector<2x32xf32>
    %15 = arith.maximumf %13, %14 : vector<2x32xf32>
    %c0_14 = arith.constant 0 : index
    %c0_15 = arith.constant 0 : index
    %16 = vector.load %arg7[%c0_14, %c0_15] : memref<32x32xf32, #tpu.memory_space<vmem>>, vector<32x32xf32>
    %cst_16 = arith.constant dense<0.000000e+00> : vector<2x32xf32>
    %17 = tpu.matmul %7, %16, %cst_16 {dimension_numbers = #tpu.dot_dimension_numbers<[1], [0], [0], [1], [0, 0, 1, 1], [], []>} : vector<2x32xf32>, vector<32x32xf32>, vector<2x32xf32> -> vector<2x32xf32>
    %c0_17 = arith.constant 0 : index
    %c0_18 = arith.constant 0 : index
    %18 = vector.load %arg8[%c0_17, %c0_18] : memref<32x32xf32, #tpu.memory_space<vmem>>, vector<32x32xf32>
    %cst_19 = arith.constant dense<0.000000e+00> : vector<2x32xf32>
    %19 = tpu.matmul %15, %18, %cst_19 {dimension_numbers = #tpu.dot_dimension_numbers<[1], [0], [0], [1], [0, 0, 1, 1], [], []>} : vector<2x32xf32>, vector<32x32xf32>, vector<2x32xf32> -> vector<2x32xf32>
    %20 = arith.addf %17, %19 : vector<2x32xf32>
    %c0_20 = arith.constant 0 : index
    %c0_21 = arith.constant 0 : index
    %21 = vector.load %arg9[%c0_20, %c0_21] : memref<1x32xf32, #tpu.memory_space<vmem>>, vector<1x32xf32>
    %22 = vector.broadcast %21 : vector<1x32xf32> to vector<2x32xf32>
    %23 = arith.addf %20, %22 : vector<2x32xf32>
    %cst_22 = arith.constant 0.000000e+00 : f32
    %24 = vector.broadcast %cst_22 : f32 to vector<2x32xf32>
    %25 = arith.maximumf %23, %24 : vector<2x32xf32>
    %c0_23 = arith.constant 0 : index
    %c0_24 = arith.constant 0 : index
    %26 = vector.load %arg10[%c0_23, %c0_24] : memref<32x16xf32, #tpu.memory_space<vmem>>, vector<32x16xf32>
    %cst_25 = arith.constant dense<0.000000e+00> : vector<2x16xf32>
    %27 = tpu.matmul %25, %26, %cst_25 {dimension_numbers = #tpu.dot_dimension_numbers<[1], [0], [0], [1], [0, 0, 1, 1], [], []>} : vector<2x32xf32>, vector<32x16xf32>, vector<2x16xf32> -> vector<2x16xf32>
    %c0_26 = arith.constant 0 : index
    %c0_27 = arith.constant 0 : index
    %28 = vector.load %arg11[%c0_26, %c0_27] : memref<1x16xf32, #tpu.memory_space<vmem>>, vector<1x16xf32>
    %29 = vector.broadcast %28 : vector<1x16xf32> to vector<2x16xf32>
    %30 = arith.addf %27, %29 : vector<2x16xf32>
    %c0_28 = arith.constant 0 : index
    %c0_29 = arith.constant 0 : index
    %31 = vector.load %arg12[%c0_28, %c0_29] : memref<2x16xf32, #tpu.memory_space<vmem>>, vector<2x16xf32>
    tpu.vector_store %arg12[%c0_28, %c0_29], %30 {strides = array<i32>} : memref<2x16xf32, #tpu.memory_space<vmem>>, vector<2x16xf32>,
    return
  }
  func.func @transform_0(%arg0: i32) -> (i32, i32) {
    %c0_i32 = arith.constant 0 : i32
    %c0_i32_0 = arith.constant 0 : i32
    return %arg0, %c0_i32 : i32, i32
  }
  func.func @transform_1(%arg0: i32) -> (i32, i32) {
    %c0_i32 = arith.constant 0 : i32
    %c0_i32_0 = arith.constant 0 : i32
    return %arg0, %c0_i32 : i32, i32
  }
  func.func @transform_2(%arg0: i32) -> (i32, i32) {
    %c0_i32 = arith.constant 0 : i32
    %c0_i32_0 = arith.constant 0 : i32
    %c0_i32_1 = arith.constant 0 : i32
    return %c0_i32, %c0_i32_0 : i32, i32
  }
  func.func @transform_3(%arg0: i32) -> (i32, i32) {
    %c0_i32 = arith.constant 0 : i32
    %c0_i32_0 = arith.constant 0 : i32
    %c0_i32_1 = arith.constant 0 : i32
    return %c0_i32, %c0_i32_0 : i32, i32
  }
  func.func @transform_4(%arg0: i32) -> (i32, i32) {
    %c0_i32 = arith.constant 0 : i32
    %c0_i32_0 = arith.constant 0 : i32
    %c0_i32_1 = arith.constant 0 : i32
    return %c0_i32, %c0_i32_0 : i32, i32
  }
  func.func @transform_5(%arg0: i32) -> (i32, i32) {
    %c0_i32 = arith.constant 0 : i32
    %c0_i32_0 = arith.constant 0 : i32
    %c0_i32_1 = arith.constant 0 : i32
    return %c0_i32, %c0_i32_0 : i32, i32
  }
  func.func @transform_6(%arg0: i32) -> (i32, i32) {
    %c0_i32 = arith.constant 0 : i32
    %c0_i32_0 = arith.constant 0 : i32
    %c0_i32_1 = arith.constant 0 : i32
    return %c0_i32, %c0_i32_0 : i32, i32
  }
  func.func @transform_7(%arg0: i32) -> (i32, i32) {
    %c0_i32 = arith.constant 0 : i32
    %c0_i32_0 = arith.constant 0 : i32
    %c0_i32_1 = arith.constant 0 : i32
    return %c0_i32, %c0_i32_0 : i32, i32
  }
  func.func @transform_8(%arg0: i32) -> (i32, i32) {
    %c0_i32 = arith.constant 0 : i32
    %c0_i32_0 = arith.constant 0 : i32
    %c0_i32_1 = arith.constant 0 : i32
    return %c0_i32, %c0_i32_0 : i32, i32
  }
  func.func @transform_9(%arg0: i32) -> (i32, i32) {
    %c0_i32 = arith.constant 0 : i32
    %c0_i32_0 = arith.constant 0 : i32
    %c0_i32_1 = arith.constant 0 : i32
    return %c0_i32, %c0_i32_0 : i32, i32
  }
  func.func @transform_10(%arg0: i32) -> (i32, i32) {
    %c0_i32 = arith.constant 0 : i32
    %c0_i32_0 = arith.constant 0 : i32
    %c0_i32_1 = arith.constant 0 : i32
    return %c0_i32, %c0_i32_0 : i32, i32
  }
  func.func @transform_11(%arg0: i32) -> (i32, i32) {
    %c0_i32 = arith.constant 0 : i32
    %c0_i32_0 = arith.constant 0 : i32
    return %arg0, %c0_i32 : i32, i32
  }
}

</mosaic_0001>

<llo_original>
// kernel: tpu_custom_call.1
$region0: #{tpu_custom_call.1}
  #allocation0 [shape = 'u32[]', space=smem, size = 0x4, offset = 0x4, fixed_abs, tag = 'smem constant byte address 0x4 - core index']
  #allocation1 [shape = 'u32[144,128]{1,0:T(1,128)}', space=vmem, size = 0x12000, scoped, tag = 'internal scratch']
  %s0 = inlined_call_operand.hbm [shape: f32[2,16], index: 0, kind: input, shape index: {}]
  %s1 = inlined_call_operand.hbm [shape: f32[2,4], index: 1, kind: input, shape index: {}]
  %s2 = inlined_call_operand.vmem [shape: f32[16,32], index: 2, kind: input, shape index: {}]
  %s3 = inlined_call_operand.hbm [shape: f32[1,32], index: 3, kind: input, shape index: {}]
  %s4 = inlined_call_operand.hbm [shape: f32[4,32], index: 4, kind: input, shape index: {}]
  %s5 = inlined_call_operand.hbm [shape: f32[1,32], index: 5, kind: input, shape index: {}]
  %s6 = inlined_call_operand.vmem [shape: f32[32,32], index: 6, kind: input, shape index: {}]
  %s7 = inlined_call_operand.hbm [shape: f32[32,32], index: 7, kind: input, shape index: {}]
  %s8 = inlined_call_operand.hbm [shape: f32[1,32], index: 8, kind: input, shape index: {}]
  %s9 = inlined_call_operand.vmem [shape: f32[32,16], index: 9, kind: input, shape index: {}]
  %s10 = inlined_call_operand.vmem [shape: f32[1,16], index: 10, kind: input, shape index: {}]
  %s11 = inlined_call_operand.hbm [shape: f32[2,16], index: 11, kind: output, shape index: {}]
  %s12 = sld [smem:[#allocation0]]
  $region82: #{tpu_custom_call.1} parent=0
    _
  %s14 = ssub.s32 1, %s12
  %s15 = scalar_select 0, %s14, %s12
  $region1: #{tpu_custom_call.1} parent=0
    #allocation2 [shape = 'u8[1024]{0}', space=vmem, size = 0x400, scoped, tag = 'input window, operand 0, single buffered']
    #allocation3 [shape = 's32[1]{0}', space=sflag, size = 0x4, scoped, tag = 'scoped memory for tpu_custom_call.1']
    #allocation4 [shape = 's32[1]{0}', space=sflag, size = 0x4, scoped, tag = 'scoped memory for tpu_custom_call.1']
    #allocation5 [shape = 'u8[1024]{0}', space=vmem, size = 0x400, scoped, tag = 'input window, operand 1, single buffered']
    #allocation6 [shape = 's32[1]{0}', space=sflag, size = 0x4, scoped, tag = 'scoped memory for tpu_custom_call.1']
    #allocation7 [shape = 'u8[512]{0}', space=vmem, size = 0x400, scoped, tag = 'input window, operand 3, single buffered']
    #allocation8 [shape = 'u8[2048]{0}', space=vmem, size = 0x800, scoped, tag = 'input window, operand 4, single buffered']
    #allocation9 [shape = 's32[1]{0}', space=sflag, size = 0x4, scoped, tag = 'scoped memory for tpu_custom_call.1']
    #allocation10 [shape = 'u8[512]{0}', space=vmem, size = 0x400, scoped, tag = 'input window, operand 5, single buffered']
    #allocation11 [shape = 'u8[16384]{0}', space=vmem, size = 0x4000, scoped, tag = 'input window, operand 7, single buffered']
    #allocation12 [shape = 's32[1]{0}', space=sflag, size = 0x4, scoped, tag = 'scoped memory for tpu_custom_call.1']
    #allocation13 [shape = 'u8[512]{0}', space=vmem, size = 0x400, scoped, tag = 'input window, operand 8, single buffered']
    #allocation14 [shape = 'u8[1024]{0}', space=vmem, size = 0x400, scoped, tag = 'output window, operand 0, single buffered']
    %16 = vsyncpa [#allocation3], 0
    %17 = vsyncpa [#allocation6], 0
    %18 = vsyncpa [#allocation9], 0
    %19 = vsyncpa [#allocation12], 0
    %20 = vsyncpa [#allocation4], 0
    // Predicated region
    $region2: #{tpu_custom_call.1} parent=1 // pred_check
      _
    $region3: #{tpu_custom_call.1} parent=1 // pred_check_branch
      %22 = sbr.rel (0) target = $region5
    $region4: #{tpu_custom_call.1} parent=1 // pred_region
      %s24 = ssub.s32 32, 32
      %25 = vsyncadd [#allocation3], %s24
      %s27 = sshll.u32 [#allocation2], 4
      %s28 = int_to_ptr.vmem [resolvable:$true] %s27
      %30 = dma.hbm_to_vmem [thread:$0]  %s0, 32, %s28, [#allocation3]
    $region5: #{tpu_custom_call.1} parent=1 // pred_fallthru
      _
    // Predicated region
    $region6: #{tpu_custom_call.1} parent=1 // pred_check
      _
    $region7: #{tpu_custom_call.1} parent=1 // pred_check_branch
      %32 = sbr.rel (0) target = $region9
    $region8: #{tpu_custom_call.1} parent=1 // pred_region
      %s34 = ssub.s32 32, 32
      %35 = vsyncadd [#allocation6], %s34
      %s37 = sshll.u32 [#allocation5], 4
      %s38 = int_to_ptr.vmem [resolvable:$true] %s37
      %40 = dma.hbm_to_vmem [thread:$0]  %s1, 32, %s38, [#allocation6]
    $region9: #{tpu_custom_call.1} parent=1 // pred_fallthru
      _
    // Predicated region
    $region10: #{tpu_custom_call.1} parent=1 // pred_check
      _
    $region11: #{tpu_custom_call.1} parent=1 // pred_check_branch
      %42 = sbr.rel (0) target = $region13
    $region12: #{tpu_custom_call.1} parent=1 // pred_region
      _
    $region13: #{tpu_custom_call.1} parent=1 // pred_fallthru
      _
    // Predicated region
    $region14: #{tpu_custom_call.1} parent=1 // pred_check
      _
    $region15: #{tpu_custom_call.1} parent=1 // pred_check_branch
      %44 = sbr.rel (0) target = $region17
    $region16: #{tpu_custom_call.1} parent=1 // pred_region
      %s46 = ssub.s32 16, 16
      %47 = vsyncadd [#allocation6], %s46
      %s49 = sshll.u32 [#allocation7], 4
      %s50 = int_to_ptr.vmem [resolvable:$true] %s49
      %52 = dma.hbm_to_vmem [thread:$0]  %s3, 16, %s50, [#allocation6]
    $region17: #{tpu_custom_call.1} parent=1 // pred_fallthru
      _
    // Predicated region
    $region18: #{tpu_custom_call.1} parent=1 // pred_check
      _
    $region19: #{tpu_custom_call.1} parent=1 // pred_check_branch
      %54 = sbr.rel (0) target = $region21
    $region20: #{tpu_custom_call.1} parent=1 // pred_region
      %s56 = ssub.s32 64, 64
      %57 = vsyncadd [#allocation9], %s56
      %s59 = sshll.u32 [#allocation8], 4
      %s60 = int_to_ptr.vmem [resolvable:$true] %s59
      %62 = dma.hbm_to_vmem [thread:$0]  %s4, 64, %s60, [#allocation9]
    $region21: #{tpu_custom_call.1} parent=1 // pred_fallthru
      _
    // Predicated region
    $region22: #{tpu_custom_call.1} parent=1 // pred_check
      _
    $region23: #{tpu_custom_call.1} parent=1 // pred_check_branch
      %64 = sbr.rel (0) target = $region25
    $region24: #{tpu_custom_call.1} parent=1 // pred_region
      %s66 = ssub.s32 16, 16
      %67 = vsyncadd [#allocation9], %s66
      %s69 = sshll.u32 [#allocation10], 4
      %s70 = int_to_ptr.vmem [resolvable:$true] %s69
      %72 = dma.hbm_to_vmem [thread:$0]  %s5, 16, %s70, [#allocation9]
    $region25: #{tpu_custom_call.1} parent=1 // pred_fallthru
      _
    // Predicated region
    $region26: #{tpu_custom_call.1} parent=1 // pred_check
      _
    $region27: #{tpu_custom_call.1} parent=1 // pred_check_branch
      %74 = sbr.rel (0) target = $region29
    $region28: #{tpu_custom_call.1} parent=1 // pred_region
      _
    $region29: #{tpu_custom_call.1} parent=1 // pred_fallthru
      _
    // Predicated region
    $region30: #{tpu_custom_call.1} parent=1 // pred_check
      _
    $region31: #{tpu_custom_call.1} parent=1 // pred_check_branch
      %76 = sbr.rel (0) target = $region33
    $region32: #{tpu_custom_call.1} parent=1 // pred_region
      %s78 = ssub.s32 512, 512
      %79 = vsyncadd [#allocation12], %s78
      %s80 = sshll.u32 [#allocation11], 4
      %s81 = int_to_ptr.vmem [resolvable:$true] %s80
      %86 = dma.hbm_to_vmem [thread:$0]  %s7, 512, %s81, [#allocation12], 128, 128, 8
    $region33: #{tpu_custom_call.1} parent=1 // pred_fallthru
      _
    // Predicated region
    $region34: #{tpu_custom_call.1} parent=1 // pred_check
      _
    $region35: #{tpu_custom_call.1} parent=1 // pred_check_branch
      %88 = sbr.rel (0) target = $region37
    $region36: #{tpu_custom_call.1} parent=1 // pred_region
      %s90 = ssub.s32 16, 16
      %91 = vsyncadd [#allocation12], %s90
      %s93 = sshll.u32 [#allocation13], 4
      %s94 = int_to_ptr.vmem [resolvable:$true] %s93
      %96 = dma.hbm_to_vmem [thread:$0]  %s8, 16, %s94, [#allocation12]
    $region37: #{tpu_custom_call.1} parent=1 // pred_fallthru
      _
    // Predicated region
    $region38: #{tpu_custom_call.1} parent=1 // pred_check
      _
    $region39: #{tpu_custom_call.1} parent=1 // pred_check_branch
      %98 = sbr.rel (0) target = $region41
    $region40: #{tpu_custom_call.1} parent=1 // pred_region
      _
    $region41: #{tpu_custom_call.1} parent=1 // pred_fallthru
      _
    // Predicated region
    $region42: #{tpu_custom_call.1} parent=1 // pred_check
      _
    $region43: #{tpu_custom_call.1} parent=1 // pred_check_branch
      %100 = sbr.rel (0) target = $region45
    $region44: #{tpu_custom_call.1} parent=1 // pred_region
      _
    $region45: #{tpu_custom_call.1} parent=1 // pred_fallthru
      _
    // Predicated region
    $region46: #{tpu_custom_call.1} parent=1 // pred_check
      _
    $region47: #{tpu_custom_call.1} parent=1 // pred_check_branch
      %102 = sbr.rel (0) target = $region49
    $region48: #{tpu_custom_call.1} parent=1 // pred_region
      %103 = dma.done [#allocation3], 32
    $region49: #{tpu_custom_call.1} parent=1 // pred_fallthru
      _
    // Predicated region
    $region50: #{tpu_custom_call.1} parent=1 // pred_check
      _
    $region51: #{tpu_custom_call.1} parent=1 // pred_check_branch
      %105 = sbr.rel (0) target = $region53
    $region52: #{tpu_custom_call.1} parent=1 // pred_region
      %106 = dma.done [#allocation6], 32
    $region53: #{tpu_custom_call.1} parent=1 // pred_fallthru
      _
    // Predicated region
    $region54: #{tpu_custom_call.1} parent=1 // pred_check
      _
    $region55: #{tpu_custom_call.1} parent=1 // pred_check_branch
      %108 = sbr.rel (0) target = $region57
    $region56: #{tpu_custom_call.1} parent=1 // pred_region
      %109 = dma.done [#allocation6], 16
    $region57: #{tpu_custom_call.1} parent=1 // pred_fallthru
      _
    // Predicated region
    $region58: #{tpu_custom_call.1} parent=1 // pred_check
      _
    $region59: #{tpu_custom_call.1} parent=1 // pred_check_branch
      %111 = sbr.rel (0) target = $region61
    $region60: #{tpu_custom_call.1} parent=1 // pred_region
      %112 = dma.done [#allocation9], 64
    $region61: #{tpu_custom_call.1} parent=1 // pred_fallthru
      _
    // Predicated region
    $region62: #{tpu_custom_call.1} parent=1 // pred_check
      _
    $region63: #{tpu_custom_call.1} parent=1 // pred_check_branch
      %114 = sbr.rel (0) target = $region65
    $region64: #{tpu_custom_call.1} parent=1 // pred_region
      %115 = dma.done [#allocation9], 16
    $region65: #{tpu_custom_call.1} parent=1 // pred_fallthru
      _
    // Predicated region
    $region66: #{tpu_custom_call.1} parent=1 // pred_check
      _
    $region67: #{tpu_custom_call.1} parent=1 // pred_check_branch
      %117 = sbr.rel (0) target = $region69
    $region68: #{tpu_custom_call.1} parent=1 // pred_region
      %118 = dma.done [#allocation12], 512
    $region69: #{tpu_custom_call.1} parent=1 // pred_fallthru
      _
    // Predicated region
    $region70: #{tpu_custom_call.1} parent=1 // pred_check
      _
    $region71: #{tpu_custom_call.1} parent=1 // pred_check_branch
      %120 = sbr.rel (0) target = $region73
    $region72: #{tpu_custom_call.1} parent=1 // pred_region
      %121 = dma.done [#allocation12], 16
    $region73: #{tpu_custom_call.1} parent=1 // pred_fallthru
      _
    %v122 = vld [vmem:[#allocation2] sm:$0x3]
    %v123 = vld [vmem:[%s2] sm:$0xff]
    %v124 = vld [vmem:[%s2 + $0x8] sm:$0xff]
    %v125 = vld [vmem:[#allocation7] sm:$0x1]
    %v127 = vlaneseq
    %v128 = vshrl.u32 %v127, 7
    %v129 = vsub.s32 0, %v128
    %v130 = vrot.slane %v125, %v129
    %vm132 = vcmask 130048
    %v134 = vsel %vm132, %v122, 0
    %136 = vmatprep.subr.mxu0 0.0
    %137 = vmatpush1.msra.mxu0 0.0
    %138 = vmatprep.subr.mxu0 0.0
    %139 = vmatpush1.msra.mxu0 0.0
    %140 = vmatprep.subr.mxu0 0.0
    %141 = vmatpush1.msra.mxu0 0.0
    %142 = vmatprep.subr.mxu0 0.0
    %143 = vmatpush1.msra.mxu0 0.0
    %144 = vmatprep.subr.mxu0 0.0
    %145 = vmatpush1.msra.mxu0 0.0
    %146 = vmatprep.subr.mxu0 0.0
    %147 = vmatpush1.msra.mxu0 0.0
    %148 = vmatprep.subr.mxu0 0.0
    %149 = vmatpush1.msra.mxu0 0.0
    %150 = vmatprep.subr.mxu0 0.0
    %151 = vmatpush1.msra.mxu0 0.0
    %152 = vmatprep.subr.mxu0 0.0
    %153 = vmatpush1.msra.mxu0 0.0
    %154 = vmatprep.subr.mxu0 0.0
    %155 = vmatpush1.msra.mxu0 0.0
    %156 = vmatprep.subr.mxu0 0.0
    %157 = vmatpush1.msra.mxu0 0.0
    %158 = vmatprep.subr.mxu0 0.0
    %159 = vmatpush1.msra.mxu0 0.0
    %160 = vmatprep.subr.mxu0 0.0
    %161 = vmatpush1.msra.mxu0 0.0
    %162 = vmatprep.subr.mxu0 0.0
    %163 = vmatpush1.msra.mxu0 0.0
    %164 = vmatprep.subr.mxu0 0.0
    %165 = vmatpush1.msra.mxu0 %v124
    %166 = vmatprep.subr.mxu0 0.0
    %167 = vmatpush1.msra.mxu0 %v123
    %168 = vmatprep.subr.mxu0 0.0
    %169 = vmatpush2.msra.mxu0 0.0
    %170 = vmatprep.subr.mxu0 0.0
    %171 = vmatpush2.msra.mxu0 0.0
    %172 = vmatprep.subr.mxu0 0.0
    %173 = vmatpush2.msra.mxu0 0.0
    %174 = vmatprep.subr.mxu0 0.0
    %175 = vmatpush2.msra.mxu0 0.0
    %176 = vmatprep.subr.mxu0 0.0
    %177 = vmatpush2.msra.mxu0 0.0
    %178 = vmatprep.subr.mxu0 0.0
    %179 = vmatpush2.msra.mxu0 0.0
    %180 = vmatprep.subr.mxu0 0.0
    %181 = vmatpush2.msra.mxu0 0.0
    %182 = vmatprep.subr.mxu0 0.0
    %183 = vmatpush2.msra.mxu0 0.0
    %184 = vmatprep.subr.mxu0 0.0
    %185 = vmatpush2.msra.mxu0 0.0
    %186 = vmatprep.subr.mxu0 0.0
    %187 = vmatpush2.msra.mxu0 0.0
    %188 = vmatprep.subr.mxu0 0.0
    %189 = vmatpush2.msra.mxu0 0.0
    %190 = vmatprep.subr.mxu0 0.0
    %191 = vmatpush2.msra.mxu0 0.0
    %192 = vmatprep.subr.mxu0 0.0
    %193 = vmatpush2.msra.mxu0 0.0
    %194 = vmatprep.subr.mxu0 0.0
    %195 = vmatpush2.msra.mxu0 0.0
    %196 = vmatprep.subr.mxu0 0.0
    %197 = vmatpush2.msra.mxu0 0.0
    %198 = vmatprep.subr.mxu0 0.0
    %199 = vmatpush2.msra.mxu0 0.0
    %200 = vmatprep.mubr.f32.mxu0 0.0
    %201 = vmatmul.mubr.f32.gmra.mxu0 %v134
    %v202 = vpop.f32.mrf.mxu0
    %v203 = vadd.f32 %v130, %v202
    %v204 = vpop.f32.mrf.mxu0
    %205 = vdwg.mxu0
    %v206 = vmax.f32 %v203, 0.0
    %v207 = vld [vmem:[#allocation5] sm:$0x3]
    %v208 = vld [vmem:[#allocation8] sm:$0xf]
    %v209 = vld [vmem:[#allocation10] sm:$0x1]
    %v211 = vlaneseq
    %v212 = vshrl.u32 %v211, 7
    %v213 = vsub.s32 0, %v212
    %v214 = vrot.slane %v209, %v213
    %vm216 = vcmask 31744
    %v218 = vsel %vm216, %v207, 0
    %vm220 = vcmask 1043456
    %v222 = vsel %vm220, %v208, 0
    %224 = vmatprep.subr.mxu0 0.0
    %225 = vmatpush1.msra.mxu0 0.0
    %226 = vmatprep.subr.mxu0 0.0
    %227 = vmatpush1.msra.mxu0 0.0
    %228 = vmatprep.subr.mxu0 0.0
    %229 = vmatpush1.msra.mxu0 0.0
    %230 = vmatprep.subr.mxu0 0.0
    %231 = vmatpush1.msra.mxu0 0.0
    %232 = vmatprep.subr.mxu0 0.0
    %233 = vmatpush1.msra.mxu0 0.0
    %234 = vmatprep.subr.mxu0 0.0
    %235 = vmatpush1.msra.mxu0 0.0
    %236 = vmatprep.subr.mxu0 0.0
    %237 = vmatpush1.msra.mxu0 0.0
    %238 = vmatprep.subr.mxu0 0.0
    %239 = vmatpush1.msra.mxu0 0.0
    %240 = vmatprep.subr.mxu0 0.0
    %241 = vmatpush1.msra.mxu0 0.0
    %242 = vmatprep.subr.mxu0 0.0
    %243 = vmatpush1.msra.mxu0 0.0
    %244 = vmatprep.subr.mxu0 0.0
    %245 = vmatpush1.msra.mxu0 0.0
    %246 = vmatprep.subr.mxu0 0.0
    %247 = vmatpush1.msra.mxu0 0.0
    %248 = vmatprep.subr.mxu0 0.0
    %249 = vmatpush1.msra.mxu0 0.0
    %250 = vmatprep.subr.mxu0 0.0
    %251 = vmatpush1.msra.mxu0 0.0
    %252 = vmatprep.subr.mxu0 0.0
    %253 = vmatpush1.msra.mxu0 0.0
    %254 = vmatprep.subr.mxu0 0.0
    %255 = vmatpush1.msra.mxu0 %v222
    %256 = vmatprep.subr.mxu0 0.0
    %257 = vmatpush2.msra.mxu0 0.0
    %258 = vmatprep.subr.mxu0 0.0
    %259 = vmatpush2.msra.mxu0 0.0
    %260 = vmatprep.subr.mxu0 0.0
    %261 = vmatpush2.msra.mxu0 0.0
    %262 = vmatprep.subr.mxu0 0.0
    %263 = vmatpush2.msra.mxu0 0.0
    %264 = vmatprep.subr.mxu0 0.0
    %265 = vmatpush2.msra.mxu0 0.0
    %266 = vmatprep.subr.mxu0 0.0
    %267 = vmatpush2.msra.mxu0 0.0
    %268 = vmatprep.subr.mxu0 0.0
    %269 = vmatpush2.msra.mxu0 0.0
    %270 = vmatprep.subr.mxu0 0.0
    %271 = vmatpush2.msra.mxu0 0.0
    %272 = vmatprep.subr.mxu0 0.0
    %273 = vmatpush2.msra.mxu0 0.0
    %274 = vmatprep.subr.mxu0 0.0
    %275 = vmatpush2.msra.mxu0 0.0
    %276 = vmatprep.subr.mxu0 0.0
    %277 = vmatpush2.msra.mxu0 0.0
    %278 = vmatprep.subr.mxu0 0.0
    %279 = vmatpush2.msra.mxu0 0.0
    %280 = vmatprep.subr.mxu0 0.0
    %281 = vmatpush2.msra.mxu0 0.0
    %282 = vmatprep.subr.mxu0 0.0
    %283 = vmatpush2.msra.mxu0 0.0
    %284 = vmatprep.subr.mxu0 0.0
    %285 = vmatpush2.msra.mxu0 0.0
    %286 = vmatprep.subr.mxu0 0.0
    %287 = vmatpush2.msra.mxu0 0.0
    %288 = vmatprep.mubr.f32.mxu0 0.0
    %289 = vmatmul.mubr.f32.gmra.mxu0 %v218
    %v290 = vpop.f32.mrf.mxu0
    %v291 = vadd.f32 %v214, %v290
    %v292 = vpop.f32.mrf.mxu0
    %293 = vdwg.mxu0
    %v294 = vmax.f32 %v291, 0.0
    %v295 = vld [vmem:[%s6] sm:$0xff]
    %v296 = vld [vmem:[%s6 + $0x8] sm:$0xff]
    %v297 = vld [vmem:[%s6 + $0x10] sm:$0xff]
    %v298 = vld [vmem:[%s6 + $0x18] sm:$0xff]
    %v299 = vld [vmem:[#allocation11] sm:$0xff]
    %v300 = vld [vmem:[#allocation11 + $0x8] sm:$0xff]
    %v301 = vld [vmem:[#allocation11 + $0x10] sm:$0xff]
    %v302 = vld [vmem:[#allocation11 + $0x18] sm:$0xff]
    %vm303 = vcmask 261120
    %v305 = vsel %vm303, %v294, 0
    %307 = vmatprep.subr.mxu0 0.0
    %308 = vmatpush1.msra.mxu0 0.0
    %309 = vmatprep.subr.mxu0 0.0
    %310 = vmatpush1.msra.mxu0 0.0
    %311 = vmatprep.subr.mxu0 0.0
    %312 = vmatpush1.msra.mxu0 0.0
    %313 = vmatprep.subr.mxu0 0.0
    %314 = vmatpush1.msra.mxu0 0.0
    %315 = vmatprep.subr.mxu0 0.0
    %316 = vmatpush1.msra.mxu0 0.0
    %317 = vmatprep.subr.mxu0 0.0
    %318 = vmatpush1.msra.mxu0 0.0
    %319 = vmatprep.subr.mxu0 0.0
    %320 = vmatpush1.msra.mxu0 0.0
    %321 = vmatprep.subr.mxu0 0.0
    %322 = vmatpush1.msra.mxu0 0.0
    %323 = vmatprep.subr.mxu0 0.0
    %324 = vmatpush1.msra.mxu0 0.0
    %325 = vmatprep.subr.mxu0 0.0
    %326 = vmatpush1.msra.mxu0 0.0
    %327 = vmatprep.subr.mxu0 0.0
    %328 = vmatpush1.msra.mxu0 0.0
    %329 = vmatprep.subr.mxu0 0.0
    %330 = vmatpush1.msra.mxu0 0.0
    %331 = vmatprep.subr.mxu0 0.0
    %332 = vmatpush1.msra.mxu0 %v302
    %333 = vmatprep.subr.mxu0 0.0
    %334 = vmatpush1.msra.mxu0 %v301
    %335 = vmatprep.subr.mxu0 0.0
    %336 = vmatpush1.msra.mxu0 %v300
    %337 = vmatprep.subr.mxu0 0.0
    %338 = vmatpush1.msra.mxu0 %v299
    %339 = vmatprep.subr.mxu0 0.0
    %340 = vmatpush2.msra.mxu0 0.0
    %341 = vmatprep.subr.mxu0 0.0
    %342 = vmatpush2.msra.mxu0 0.0
    %343 = vmatprep.subr.mxu0 0.0
    %344 = vmatpush2.msra.mxu0 0.0
    %345 = vmatprep.subr.mxu0 0.0
    %346 = vmatpush2.msra.mxu0 0.0
    %347 = vmatprep.subr.mxu0 0.0
    %348 = vmatpush2.msra.mxu0 0.0
    %349 = vmatprep.subr.mxu0 0.0
    %350 = vmatpush2.msra.mxu0 0.0
    %351 = vmatprep.subr.mxu0 0.0
    %352 = vmatpush2.msra.mxu0 0.0
    %353 = vmatprep.subr.mxu0 0.0
    %354 = vmatpush2.msra.mxu0 0.0
    %355 = vmatprep.subr.mxu0 0.0
    %356 = vmatpush2.msra.mxu0 0.0
    %357 = vmatprep.subr.mxu0 0.0
    %358 = vmatpush2.msra.mxu0 0.0
    %359 = vmatprep.subr.mxu0 0.0
    %360 = vmatpush2.msra.mxu0 0.0
    %361 = vmatprep.subr.mxu0 0.0
    %362 = vmatpush2.msra.mxu0 0.0
    %363 = vmatprep.subr.mxu0 0.0
    %364 = vmatpush2.msra.mxu0 0.0
    %365 = vmatprep.subr.mxu0 0.0
    %366 = vmatpush2.msra.mxu0 0.0
    %367 = vmatprep.subr.mxu0 0.0
    %368 = vmatpush2.msra.mxu0 0.0
    %369 = vmatprep.subr.mxu0 0.0
    %370 = vmatpush2.msra.mxu0 0.0
    %371 = vmatprep.mubr.f32.mxu0 0.0
    %372 = vmatmul.mubr.f32.gmra.mxu0 %v305
    %v373 = vpop.f32.mrf.mxu0
    %v374 = vadd.f32 0.0, %v373
    %v375 = vpop.f32.mrf.mxu0
    %376 = vdwg.mxu0
    %v378 = vsel %vm303, %v206, 0
    %380 = vmatprep.subr.mxu0 0.0
    %381 = vmatpush1.msra.mxu0 0.0
    %382 = vmatprep.subr.mxu0 0.0
    %383 = vmatpush1.msra.mxu0 0.0
    %384 = vmatprep.subr.mxu0 0.0
    %385 = vmatpush1.msra.mxu0 0.0
    %386 = vmatprep.subr.mxu0 0.0
    %387 = vmatpush1.msra.mxu0 0.0
    %388 = vmatprep.subr.mxu0 0.0
    %389 = vmatpush1.msra.mxu0 0.0
    %390 = vmatprep.subr.mxu0 0.0
    %391 = vmatpush1.msra.mxu0 0.0
    %392 = vmatprep.subr.mxu0 0.0
    %393 = vmatpush1.msra.mxu0 0.0
    %394 = vmatprep.subr.mxu0 0.0
    %395 = vmatpush1.msra.mxu0 0.0
    %396 = vmatprep.subr.mxu0 0.0
    %397 = vmatpush1.msra.mxu0 0.0
    %398 = vmatprep.subr.mxu0 0.0
    %399 = vmatpush1.msra.mxu0 0.0
    %400 = vmatprep.subr.mxu0 0.0
    %401 = vmatpush1.msra.mxu0 0.0
    %402 = vmatprep.subr.mxu0 0.0
    %403 = vmatpush1.msra.mxu0 0.0
    %404 = vmatprep.subr.mxu0 0.0
    %405 = vmatpush1.msra.mxu0 %v298
    %406 = vmatprep.subr.mxu0 0.0
    %407 = vmatpush1.msra.mxu0 %v297
    %408 = vmatprep.subr.mxu0 0.0
    %409 = vmatpush1.msra.mxu0 %v296
    %410 = vmatprep.subr.mxu0 0.0
    %411 = vmatpush1.msra.mxu0 %v295
    %412 = vmatprep.subr.mxu0 0.0
    %413 = vmatpush2.msra.mxu0 0.0
    %414 = vmatprep.subr.mxu0 0.0
    %415 = vmatpush2.msra.mxu0 0.0
    %416 = vmatprep.subr.mxu0 0.0
    %417 = vmatpush2.msra.mxu0 0.0
    %418 = vmatprep.subr.mxu0 0.0
    %419 = vmatpush2.msra.mxu0 0.0
    %420 = vmatprep.subr.mxu0 0.0
    %421 = vmatpush2.msra.mxu0 0.0
    %422 = vmatprep.subr.mxu0 0.0
    %423 = vmatpush2.msra.mxu0 0.0
    %424 = vmatprep.subr.mxu0 0.0
    %425 = vmatpush2.msra.mxu0 0.0
    %426 = vmatprep.subr.mxu0 0.0
    %427 = vmatpush2.msra.mxu0 0.0
    %428 = vmatprep.subr.mxu0 0.0
    %429 = vmatpush2.msra.mxu0 0.0
    %430 = vmatprep.subr.mxu0 0.0
    %431 = vmatpush2.msra.mxu0 0.0
    %432 = vmatprep.subr.mxu0 0.0
    %433 = vmatpush2.msra.mxu0 0.0
    %434 = vmatprep.subr.mxu0 0.0
    %435 = vmatpush2.msra.mxu0 0.0
    %436 = vmatprep.subr.mxu0 0.0
    %437 = vmatpush2.msra.mxu0 0.0
    %438 = vmatprep.subr.mxu0 0.0
    %439 = vmatpush2.msra.mxu0 0.0
    %440 = vmatprep.subr.mxu0 0.0
    %441 = vmatpush2.msra.mxu0 0.0
    %442 = vmatprep.subr.mxu0 0.0
    %443 = vmatpush2.msra.mxu0 0.0
    %444 = vmatprep.mubr.f32.mxu0 0.0
    %445 = vmatmul.mubr.f32.gmra.mxu0 %v378
    %v446 = vpop.f32.mrf.mxu0
    %v447 = vadd.f32 %v374, %v446
    %v448 = vpop.f32.mrf.mxu0
    %449 = vdwg.mxu0
    %v450 = vld [vmem:[#allocation13] sm:$0x1]
    %v452 = vlaneseq
    %v453 = vshrl.u32 %v452, 7
    %v454 = vsub.s32 0, %v453
    %v455 = vrot.slane %v450, %v454
    %v457 = vadd.f32 %v447, %v455
    %v458 = vmax.f32 %v457, 0.0
    %v459 = vld [vmem:[%s9] sm:$0xff]
    %v460 = vld [vmem:[%s9 + $0x8] sm:$0xff]
    %v461 = vld [vmem:[%s9 + $0x10] sm:$0xff]
    %v462 = vld [vmem:[%s9 + $0x18] sm:$0xff]
    %v463 = vld [vmem:[%s10] sm:$0x1]
    %v465 = vlaneseq
    %v466 = vshrl.u32 %v465, 7
    %v467 = vsub.s32 0, %v466
    %v468 = vrot.slane %v463, %v467
    %v471 = vsel %vm303, %v458, 0
    %473 = vmatprep.subr.mxu0 0.0
    %474 = vmatpush1.msra.mxu0 0.0
    %475 = vmatprep.subr.mxu0 0.0
    %476 = vmatpush1.msra.mxu0 0.0
    %477 = vmatprep.subr.mxu0 0.0
    %478 = vmatpush1.msra.mxu0 0.0
    %479 = vmatprep.subr.mxu0 0.0
    %480 = vmatpush1.msra.mxu0 0.0
    %481 = vmatprep.subr.mxu0 0.0
    %482 = vmatpush1.msra.mxu0 0.0
    %483 = vmatprep.subr.mxu0 0.0
    %484 = vmatpush1.msra.mxu0 0.0
    %485 = vmatprep.subr.mxu0 0.0
    %486 = vmatpush1.msra.mxu0 0.0
    %487 = vmatprep.subr.mxu0 0.0
    %488 = vmatpush1.msra.mxu0 0.0
    %489 = vmatprep.subr.mxu0 0.0
    %490 = vmatpush1.msra.mxu0 0.0
    %491 = vmatprep.subr.mxu0 0.0
    %492 = vmatpush1.msra.mxu0 0.0
    %493 = vmatprep.subr.mxu0 0.0
    %494 = vmatpush1.msra.mxu0 0.0
    %495 = vmatprep.subr.mxu0 0.0
    %496 = vmatpush1.msra.mxu0 0.0
    %497 = vmatprep.subr.mxu0 0.0
    %498 = vmatpush1.msra.mxu0 %v462
    %499 = vmatprep.subr.mxu0 0.0
    %500 = vmatpush1.msra.mxu0 %v461
    %501 = vmatprep.subr.mxu0 0.0
    %502 = vmatpush1.msra.mxu0 %v460
    %503 = vmatprep.subr.mxu0 0.0
    %504 = vmatpush1.msra.mxu0 %v459
    %505 = vmatprep.subr.mxu0 0.0
    %506 = vmatpush2.msra.mxu0 0.0
    %507 = vmatprep.subr.mxu0 0.0
    %508 = vmatpush2.msra.mxu0 0.0
    %509 = vmatprep.subr.mxu0 0.0
    %510 = vmatpush2.msra.mxu0 0.0
    %511 = vmatprep.subr.mxu0 0.0
    %512 = vmatpush2.msra.mxu0 0.0
    %513 = vmatprep.subr.mxu0 0.0
    %514 = vmatpush2.msra.mxu0 0.0
    %515 = vmatprep.subr.mxu0 0.0
    %516 = vmatpush2.msra.mxu0 0.0
    %517 = vmatprep.subr.mxu0 0.0
    %518 = vmatpush2.msra.mxu0 0.0
    %519 = vmatprep.subr.mxu0 0.0
    %520 = vmatpush2.msra.mxu0 0.0
    %521 = vmatprep.subr.mxu0 0.0
    %522 = vmatpush2.msra.mxu0 0.0
    %523 = vmatprep.subr.mxu0 0.0
    %524 = vmatpush2.msra.mxu0 0.0
    %525 = vmatprep.subr.mxu0 0.0
    %526 = vmatpush2.msra.mxu0 0.0
    %527 = vmatprep.subr.mxu0 0.0
    %528 = vmatpush2.msra.mxu0 0.0
    %529 = vmatprep.subr.mxu0 0.0
    %530 = vmatpush2.msra.mxu0 0.0
    %531 = vmatprep.subr.mxu0 0.0
    %532 = vmatpush2.msra.mxu0 0.0
    %533 = vmatprep.subr.mxu0 0.0
    %534 = vmatpush2.msra.mxu0 0.0
    %535 = vmatprep.subr.mxu0 0.0
    %536 = vmatpush2.msra.mxu0 0.0
    %537 = vmatprep.mubr.f32.mxu0 0.0
    %538 = vmatmul.mubr.f32.gmra.mxu0 %v471
    %v539 = vpop.f32.mrf.mxu0
    %v540 = vadd.f32 %v468, %v539
    %v541 = vpop.f32.mrf.mxu0
    %542 = vdwg.mxu0
    %vm543 = vcmask 123904
    %544 = vst.msk [vmem:[#allocation14] sm:$0x3] %vm543, %v540
    // Predicated region
    $region74: #{tpu_custom_call.1} parent=1 // pred_check
      _
    $region75: #{tpu_custom_call.1} parent=1 // pred_check_branch
      %546 = sbr.rel (0) target = $region77
    $region76: #{tpu_custom_call.1} parent=1 // pred_region
      %s548 = ssub.s32 32, 32
      %549 = vsyncadd [#allocation4], %s548
      %s551 = sshll.u32 [#allocation14], 4
      %s552 = int_to_ptr.vmem [resolvable:$true] %s551
      %554 = dma.vmem_to_hbm [thread:$0]  %s552, 32, %s11, [#allocation4]
    $region77: #{tpu_custom_call.1} parent=1 // pred_fallthru
      _
    // Predicated region
    $region78: #{tpu_custom_call.1} parent=1 // pred_check
      _
    $region79: #{tpu_custom_call.1} parent=1 // pred_check_branch
      %556 = sbr.rel (0) target = $region81
    $region80: #{tpu_custom_call.1} parent=1 // pred_region
      %557 = dma.done [#allocation4], 32
    $region81: #{tpu_custom_call.1} parent=1 // pred_fallthru
      _
    %558 = vsyncpa [#allocation3], 1
    %559 = vsyncpa [#allocation6], 1
    %560 = vsyncpa [#allocation9], 1
    %561 = vsyncpa [#allocation12], 1
    %562 = vsyncpa [#allocation4], 1

</llo_original>
